<compile_context>
chip_gen: v7x
topology: tpu7x:2x2x1
jax: 0.10.0
libtpu: 0.0.40
codegen_flags: <defaults>
</compile_context>

<pallas_src>
import functools
import math

import jax
import jax.numpy as jnp
from jax.experimental import pallas as pl
from jax.experimental.pallas import tpu as pltpu

_LANE = 128     # keep output last dim a multiple of this (unmasked vst)
_SUBLANE = 8    # f32 sublane height


def _round_up(v: int, m: int) -> int:
    return (v + m - 1) // m * m


# ----------------------------- pass 1: softplus(F) ---------------------------
def _softplus_kernel(f_ref, o_ref):
    # Numerically stable softplus in f32, stored in the matmul-operand dtype.
    o_ref[...] = jnp.logaddexp(f_ref[...].astype(jnp.float32), 0.0).astype(o_ref.dtype)


def _softplus_to_hbm(f, op_dtype, *, vmem_limit_bytes, vmem_budget):
    """softplus(f) computed exactly once, tiled over output_dim."""
    K, Np = f.shape
    op_bytes = jnp.dtype(op_dtype).itemsize
    tn = math.gcd(Np, 1024)                      # multiple of 128 dividing Np
    while 2 * K * tn * (4 + op_bytes) > vmem_budget and tn > _LANE:
        tn //= 2
    return pl.pallas_call(
        _softplus_kernel,
        out_shape=jax.ShapeDtypeStruct((K, Np), op_dtype),
        grid_spec=pltpu.PrefetchScalarGridSpec(
            num_scalar_prefetch=0,
            grid=(Np // tn,),
            in_specs=[pl.BlockSpec((K, tn), lambda j: (0, j))],
            out_specs=pl.BlockSpec((K, tn), lambda j: (0, j)),
        ),
        compiler_params=pltpu.CompilerParams(
            dimension_semantics=("parallel",),
            vmem_limit_bytes=vmem_limit_bytes,
        ),
    )(f)


# ----------------------------- pass 2: matmul --------------------------------
def _pois_matmul_kernel(x_ref, fsp_ref, o_ref, *, op_dtype):
    # (tm, K) @ (K, tn) -> (tm, tn) on the MXU; f32 accumulate, f32 store.
    o_ref[...] = jnp.dot(
        x_ref[...].astype(op_dtype),
        fsp_ref[...],
        preferred_element_type=jnp.float32,
    )


def pois_forward(x, f, *, tm=512, tn=512, bf16_matmul=False,
                 resident_fsp_bytes=8 * 2**20,
                 vmem_limit_bytes=48 * 2**20):
    """lambda = x @ softplus(f)."""
    M, K = x.shape
    K2, N = f.shape
    assert K == K2, "inner dims must match"

    op_dtype = jnp.bfloat16 if bf16_matmul else jnp.float32
    op_bytes = jnp.dtype(op_dtype).itemsize
    vmem_budget = int(vmem_limit_bytes * 0.75)   # headroom for internal scratch

    x = x.astype(jnp.float32)
    f = f.astype(jnp.float32)

    # Lane-dense output: pad output_dim to a multiple of 128 so stores are
    # unmasked vst (narrow-lane tiles have a measured ~4.5x writeback penalty).
    Np = _round_up(N, _LANE)
    if Np != N:
        f = jnp.pad(f, ((0, 0), (0, Np - N)))

    # softplus(F) exactly once (no init-once scratch in the matmul kernel).
    fsp = _softplus_to_hbm(f, op_dtype,
                           vmem_limit_bytes=vmem_limit_bytes,
                           vmem_budget=vmem_budget)

    kernel = functools.partial(_pois_matmul_kernel, op_dtype=op_dtype)
    fsp_resident = 2 * K * Np * op_bytes <= resident_fsp_bytes

    if fsp_resident:
        # ---- resident-F path: 1-D parallel grid over M, x read from HBM once.
        tm_eff = min(_round_up(tm, _SUBLANE), _round_up(M, _SUBLANE))
        footprint = lambda t: (2 * t * K * 4            # x  (double-buffered)
                               + 2 * K * Np * op_bytes  # fsp (resident)
                               + 2 * t * Np * 4)        # out (double-buffered)
        while footprint(tm_eff) > vmem_budget and tm_eff > _SUBLANE:
            tm_eff = max(_SUBLANE, _round_up(tm_eff // 2, _SUBLANE))
        Mp = _round_up(M, tm_eff)
        xp = jnp.pad(x, ((0, Mp - M), (0, 0))) if Mp != M else x

        out = pl.pallas_call(
            kernel,
            out_shape=jax.ShapeDtypeStruct((Mp, Np), jnp.float32),
            grid_spec=pltpu.PrefetchScalarGridSpec(
                num_scalar_prefetch=0,
                grid=(Mp // tm_eff,),
                in_specs=[
                    # x row tile: each tile DMA'd exactly once.  (If profiling
                    # shows exposed x DMA, add pipeline_mode=pl.Buffered(3).)
                    pl.BlockSpec((tm_eff, K), lambda i: (i, 0)),
                    # softplus(F): constant block index -> fetched once, stays
                    # resident in VMEM for the whole grid.
                    pl.BlockSpec((K, Np), lambda i: (0, 0)),
                ],
                out_specs=pl.BlockSpec((tm_eff, Np), lambda i: (i, 0)),
            ),
            compiler_params=pltpu.CompilerParams(
                dimension_semantics=("parallel",),
                vmem_limit_bytes=vmem_limit_bytes,
            ),
        )(xp, fsp)
    else:
        # ---- tiled-N fallback: softplus(F) too large for VMEM residency.
        # TODO(synk): for input_dim K >~ 4k the untiled-K blocks get large; add
        # an innermost "arbitrary" K grid axis with an f32 accumulator scratch.
        if bf16_matmul:
            # x is re-read once per N tile here -> halve its HBM stream.
            x = x.astype(jnp.bfloat16)
        x_bytes = jnp.dtype(x.dtype).itemsize
        tn_eff = math.gcd(Np, max(_LANE, _round_up(tn, _LANE)))
        tm_eff = min(_round_up(tm, _SUBLANE), _round_up(M, _SUBLANE))
        footprint = lambda t: (2 * t * K * x_bytes
                               + 2 * K * tn_eff * op_bytes
                               + 2 * t * tn_eff * 4)
        while footprint(tm_eff) > vmem_budget and tm_eff > _SUBLANE:
            tm_eff = max(_SUBLANE, _round_up(tm_eff // 2, _SUBLANE))
        Mp = _round_up(M, tm_eff)
        xp = jnp.pad(x, ((0, Mp - M), (0, 0))) if Mp != M else x

        out = pl.pallas_call(
            kernel,
            out_shape=jax.ShapeDtypeStruct((Mp, Np), jnp.float32),
            grid_spec=pltpu.PrefetchScalarGridSpec(
                num_scalar_prefetch=0,
                grid=(Np // tn_eff, Mp // tm_eff),   # N outer, M inner
                in_specs=[
                    pl.BlockSpec((tm_eff, K), lambda j, i: (i, 0)),
                    # F column tile: constant over the inner M axis (read once
                    # per N tile from HBM).
                    pl.BlockSpec((K, tn_eff), lambda j, i: (0, j)),
                ],
                out_specs=pl.BlockSpec((tm_eff, tn_eff), lambda j, i: (i, j)),
            ),
            compiler_params=pltpu.CompilerParams(
                # no cross-step state -> both axes are truly independent
                dimension_semantics=("parallel", "parallel"),
                vmem_limit_bytes=vmem_limit_bytes,
            ),
        )(xp, fsp)

    if Mp != M or Np != N:
        out = out[:M, :N]
    return out


if __name__ == "__main__":
    # Small shapes consistent with the module: M cells, input_dim -> output_dim.
    M, INPUT_DIM, OUTPUT_DIM = 8, 32, 256

    key = jax.random.PRNGKey(0)
    kx, kf = jax.random.split(key)
    x = jax.random.normal(kx, (M, INPUT_DIM), dtype=jnp.float32)
    f = jax.random.normal(kf, (INPUT_DIM, OUTPUT_DIM), dtype=jnp.float32)

    ref = x @ jax.nn.softplus(f)

    # f32, resident-F path (the common case): tight tolerance.
    out = pois_forward(x, f)
    jax.block_until_ready(out)
    assert out.shape == (M, OUTPUT_DIM)
    assert jnp.allclose(out, ref, atol=1e-4, rtol=1e-4)

    # bf16 MXU-operand path (recommended on v5e/v6e/v7x for large shapes);
    # softplus itself stays in f32, only matmul operands are narrowed.
    out_bf16 = pois_forward(x, f, bf16_matmul=True)
    jax.block_until_ready(out_bf16)
    assert jnp.allclose(out_bf16, ref, atol=5e-2, rtol=5e-2)

    # Exercise the tiled-N fallback path by forcing a zero residency budget.
    out_tiled = pois_forward(x, f, resident_fsp_bytes=0)
    jax.block_until_ready(out_tiled)
    assert jnp.allclose(out_tiled, ref, atol=1e-4, rtol=1e-4)

    # Ragged shapes: padded to (8, 128)-aligned tiles internally, sliced back.
    M2, N2 = 10, 200
    x2 = jax.random.normal(jax.random.PRNGKey(1), (M2, INPUT_DIM), dtype=jnp.float32)
    f2 = jax.random.normal(jax.random.PRNGKey(2), (INPUT_DIM, N2), dtype=jnp.float32)
    out2 = pois_forward(x2, f2)
    jax.block_until_ready(out2)
    assert out2.shape == (M2, N2)
    assert jnp.allclose(out2, x2 @ jax.nn.softplus(f2), atol=1e-4, rtol=1e-4)

    print("KERNEL_OK")
</pallas_src>

<mosaic_0001>
module attributes {stable_mosaic.version = 11 : i64} {
  func.func @_softplus_kernel(%arg0: i32, %arg1: memref<32x256xf32, #tpu.memory_space<vmem>>, %arg2: memref<32x256xf32, #tpu.memory_space<vmem>>) attributes {dimension_semantics = [#tpu.dimension_semantics<parallel>], iteration_bounds = array<i64: 1>, scalar_prefetch = 0 : i64, scratch_operands = 0 : i64, tpu.core_type = #tpu.core_type<tc>, window_params = [{transform_indices = @transform_0, window_bounds = array<i64: 32, 256>}, {transform_indices = @transform_1, window_bounds = array<i64: 32, 256>}]} {
    %c0 = arith.constant 0 : index
    %c0_0 = arith.constant 0 : index
    %0 = vector.load %arg1[%c0, %c0_0] : memref<32x256xf32, #tpu.memory_space<vmem>>, vector<32x256xf32>
    %cst = arith.constant 0.000000e+00 : f32
    %1 = vector.broadcast %cst : f32 to vector<32x256xf32>
    %2 = arith.maximumf %0, %1 : vector<32x256xf32>
    %3 = vector.broadcast %cst : f32 to vector<32x256xf32>
    %4 = arith.subf %0, %3 : vector<32x256xf32>
    %5 = arith.cmpf one, %4, %4 : vector<32x256xf32>
    %6 = vector.broadcast %cst : f32 to vector<32x256xf32>
    %7 = arith.addf %0, %6 : vector<32x256xf32>
    %8 = math.absf %4 : vector<32x256xf32>
    %cst_1 = arith.constant 0.000000e+00 : f32
    %9 = vector.broadcast %cst_1 : f32 to vector<32x256xf32>
    %10 = arith.subf %9, %8 : vector<32x256xf32>
    %11 = math.exp %10 : vector<32x256xf32>
    %12 = math.log1p %11 : vector<32x256xf32>
    %13 = arith.addf %2, %12 : vector<32x256xf32>
    %14 = arith.select %5, %7, %13 : vector<32x256xi1>, vector<32x256xf32>
    %c0_2 = arith.constant 0 : index
    %c0_3 = arith.constant 0 : index
    %15 = vector.load %arg2[%c0_2, %c0_3] : memref<32x256xf32, #tpu.memory_space<vmem>>, vector<32x256xf32>
    tpu.vector_store %arg2[%c0_2, %c0_3], %14 {strides = array<i32>} : memref<32x256xf32, #tpu.memory_space<vmem>>, vector<32x256xf32>,
    return
  }
  func.func @transform_0(%arg0: i32) -> (i32, i32) {
    %c0_i32 = arith.constant 0 : i32
    %c0_i32_0 = arith.constant 0 : i32
    return %c0_i32, %arg0 : i32, i32
  }
  func.func @transform_1(%arg0: i32) -> (i32, i32) {
    %c0_i32 = arith.constant 0 : i32
    %c0_i32_0 = arith.constant 0 : i32
    return %c0_i32, %arg0 : i32, i32
  }
}

</mosaic_0001>

<llo_original>
// kernel: tpu_custom_call.1
$region0: #{tpu_custom_call.1}
  #allocation0 [shape = 'u32[]', space=smem, size = 0x4, offset = 0x4, fixed_abs, tag = 'smem constant byte address 0x4 - core index']
  #allocation1 [shape = 'u32[144,128]{1,0:T(1,128)}', space=vmem, size = 0x12000, scoped, tag = 'internal scratch']
  %s0 = inlined_call_operand.hbm [shape: f32[32,256], index: 0, kind: input, shape index: {}]
  %s1 = inlined_call_operand.hbm [shape: f32[32,256], index: 1, kind: output, shape index: {}]
  %s2 = sld [smem:[#allocation0]]
  $region18: #{tpu_custom_call.1} parent=0
    _
  %s4 = ssub.s32 1, %s2
  %s5 = scalar_select 0, %s4, %s2
  $region1: #{tpu_custom_call.1} parent=0
    #allocation2 [shape = 'u8[32768]{0}', space=vmem, size = 0x8000, scoped, tag = 'input window, operand 0, single buffered']
    #allocation3 [shape = 's32[1]{0}', space=sflag, size = 0x4, scoped, tag = 'scoped memory for tpu_custom_call.1']
    #allocation4 [shape = 's32[1]{0}', space=sflag, size = 0x4, scoped, tag = 'scoped memory for tpu_custom_call.1']
    #allocation5 [shape = 'u8[32768]{0}', space=vmem, size = 0x8000, scoped, tag = 'output window, operand 0, single buffered']
    %6 = vsyncpa [#allocation3], 0
    %7 = vsyncpa [#allocation4], 0
    // Predicated region
    $region2: #{tpu_custom_call.1} parent=1 // pred_check
      _
    $region3: #{tpu_custom_call.1} parent=1 // pred_check_branch
      %9 = sbr.rel (0) target = $region5
    $region4: #{tpu_custom_call.1} parent=1 // pred_region
      %s11 = ssub.s32 1024, 1024
      %12 = vsyncadd [#allocation3], %s11
      %s13 = sshll.u32 [#allocation2], 4
      %s14 = int_to_ptr.vmem [resolvable:$true] %s13
      %19 = dma.hbm_to_vmem [thread:$0]  %s0, 1024, %s14, [#allocation3], 256, 256, 16
    $region5: #{tpu_custom_call.1} parent=1 // pred_fallthru
      _
    // Predicated region
    $region6: #{tpu_custom_call.1} parent=1 // pred_check
      _
    $region7: #{tpu_custom_call.1} parent=1 // pred_check_branch
      %21 = sbr.rel (0) target = $region9
    $region8: #{tpu_custom_call.1} parent=1 // pred_region
      %22 = dma.done [#allocation3], 1024
    $region9: #{tpu_custom_call.1} parent=1 // pred_fallthru
      _
    %v23 = vld [vmem:[#allocation2] sm:$0xff]
    %v24 = vld [vmem:[#allocation2 + $0x8] sm:$0xff]
    %v25 = vld [vmem:[#allocation2 + $0x10] sm:$0xff]
    %v26 = vld [vmem:[#allocation2 + $0x18] sm:$0xff]
    %v27 = vld [vmem:[#allocation2 + $0x20] sm:$0xff]
    %v28 = vld [vmem:[#allocation2 + $0x28] sm:$0xff]
    %v29 = vld [vmem:[#allocation2 + $0x30] sm:$0xff]
    %v30 = vld [vmem:[#allocation2 + $0x38] sm:$0xff]
    %v31 = vmax.f32 %v23, 0.0
    %v32 = vmax.f32 %v24, 0.0
    %v33 = vmax.f32 %v25, 0.0
    %v34 = vmax.f32 %v26, 0.0
    %v35 = vmax.f32 %v27, 0.0
    %v36 = vmax.f32 %v28, 0.0
    %v37 = vmax.f32 %v29, 0.0
    %v38 = vmax.f32 %v30, 0.0
    %vm39 = vcmp.ne.f32.partialorder %v23, %v23
    %vm40 = vcmp.ne.f32.partialorder %v24, %v24
    %vm41 = vcmp.ne.f32.partialorder %v25, %v25
    %vm42 = vcmp.ne.f32.partialorder %v26, %v26
    %vm43 = vcmp.ne.f32.partialorder %v27, %v27
    %vm44 = vcmp.ne.f32.partialorder %v28, %v28
    %vm45 = vcmp.ne.f32.partialorder %v29, %v29
    %vm46 = vcmp.ne.f32.partialorder %v30, %v30
    %v47 = vadd.f32 %v23, 0.0
    %v48 = vadd.f32 %v24, 0.0
    %v49 = vadd.f32 %v25, 0.0
    %v50 = vadd.f32 %v26, 0.0
    %v51 = vadd.f32 %v27, 0.0
    %v52 = vadd.f32 %v28, 0.0
    %v53 = vadd.f32 %v29, 0.0
    %v54 = vadd.f32 %v30, 0.0
    %v55 = vand.u32 2147483647, %v23
    %v56 = vand.u32 2147483647, %v24
    %v57 = vand.u32 2147483647, %v25
    %v58 = vand.u32 2147483647, %v26
    %v59 = vand.u32 2147483647, %v27
    %v60 = vand.u32 2147483647, %v28
    %v61 = vand.u32 2147483647, %v29
    %v62 = vand.u32 2147483647, %v30
    %v63 = vsub.f32 0.0, %v55
    %v64 = vsub.f32 0.0, %v56
    %v65 = vsub.f32 0.0, %v57
    %v66 = vsub.f32 0.0, %v58
    %v67 = vsub.f32 0.0, %v59
    %v68 = vsub.f32 0.0, %v60
    %v69 = vsub.f32 0.0, %v61
    %v70 = vsub.f32 0.0, %v62
    %v71 = vmul.f32 %v63, 1.442695
    %v72 = vpow.pop %v71
    %v73 = vmul.f32 %v64, 1.442695
    %v74 = vpow.pop %v73
    %v75 = vmul.f32 %v65, 1.442695
    %v76 = vpow.pop %v75
    %v77 = vmul.f32 %v66, 1.442695
    %v78 = vpow.pop %v77
    %v79 = vmul.f32 %v67, 1.442695
    %v80 = vpow.pop %v79
    %v81 = vmul.f32 %v68, 1.442695
    %v82 = vpow.pop %v81
    %v83 = vmul.f32 %v69, 1.442695
    %v84 = vpow.pop %v83
    %v85 = vmul.f32 %v70, 1.442695
    %v86 = vpow.pop %v85
    %v87 = vadd.f32 %v72, 1.0
    %v88 = vlog2.pop %v87
    %v89 = vmul.f32 %v88, 0.6931472
    %v90 = vmul.f32 -0.5, %v72
    %v91 = vadd.f32 %v90, 1.0
    %v92 = vmul.f32 %v91, %v72
    %v93 = vand.u32 2147483647, %v72
    %vm94 = vcmp.lt.f32.partialorder %v93, 0.0004427343
    %v95 = vsel %vm94, %v92, %v89
    %v96 = vadd.f32 %v74, 1.0
    %v97 = vlog2.pop %v96
    %v98 = vmul.f32 %v97, 0.6931472
    %v99 = vmul.f32 -0.5, %v74
    %v100 = vadd.f32 %v99, 1.0
    %v101 = vmul.f32 %v100, %v74
    %v102 = vand.u32 2147483647, %v74
    %vm103 = vcmp.lt.f32.partialorder %v102, 0.0004427343
    %v104 = vsel %vm103, %v101, %v98
    %v105 = vadd.f32 %v76, 1.0
    %v106 = vlog2.pop %v105
    %v107 = vmul.f32 %v106, 0.6931472
    %v108 = vmul.f32 -0.5, %v76
    %v109 = vadd.f32 %v108, 1.0
    %v110 = vmul.f32 %v109, %v76
    %v111 = vand.u32 2147483647, %v76
    %vm112 = vcmp.lt.f32.partialorder %v111, 0.0004427343
    %v113 = vsel %vm112, %v110, %v107
    %v114 = vadd.f32 %v78, 1.0
    %v115 = vlog2.pop %v114
    %v116 = vmul.f32 %v115, 0.6931472
    %v117 = vmul.f32 -0.5, %v78
    %v118 = vadd.f32 %v117, 1.0
    %v119 = vmul.f32 %v118, %v78
    %v120 = vand.u32 2147483647, %v78
    %vm121 = vcmp.lt.f32.partialorder %v120, 0.0004427343
    %v122 = vsel %vm121, %v119, %v116
    %v123 = vadd.f32 %v80, 1.0
    %v124 = vlog2.pop %v123
    %v125 = vmul.f32 %v124, 0.6931472
    %v126 = vmul.f32 -0.5, %v80
    %v127 = vadd.f32 %v126, 1.0
    %v128 = vmul.f32 %v127, %v80
    %v129 = vand.u32 2147483647, %v80
    %vm130 = vcmp.lt.f32.partialorder %v129, 0.0004427343
    %v131 = vsel %vm130, %v128, %v125
    %v132 = vadd.f32 %v82, 1.0
    %v133 = vlog2.pop %v132
    %v134 = vmul.f32 %v133, 0.6931472
    %v135 = vmul.f32 -0.5, %v82
    %v136 = vadd.f32 %v135, 1.0
    %v137 = vmul.f32 %v136, %v82
    %v138 = vand.u32 2147483647, %v82
    %vm139 = vcmp.lt.f32.partialorder %v138, 0.0004427343
    %v140 = vsel %vm139, %v137, %v134
    %v141 = vadd.f32 %v84, 1.0
    %v142 = vlog2.pop %v141
    %v143 = vmul.f32 %v142, 0.6931472
    %v144 = vmul.f32 -0.5, %v84
    %v145 = vadd.f32 %v144, 1.0
    %v146 = vmul.f32 %v145, %v84
    %v147 = vand.u32 2147483647, %v84
    %vm148 = vcmp.lt.f32.partialorder %v147, 0.0004427343
    %v149 = vsel %vm148, %v146, %v143
    %v150 = vadd.f32 %v86, 1.0
    %v151 = vlog2.pop %v150
    %v152 = vmul.f32 %v151, 0.6931472
    %v153 = vmul.f32 -0.5, %v86
    %v154 = vadd.f32 %v153, 1.0
    %v155 = vmul.f32 %v154, %v86
    %v156 = vand.u32 2147483647, %v86
    %vm157 = vcmp.lt.f32.partialorder %v156, 0.0004427343
    %v158 = vsel %vm157, %v155, %v152
    %v159 = vadd.f32 %v31, %v95
    %v160 = vadd.f32 %v32, %v104
    %v161 = vadd.f32 %v33, %v113
    %v162 = vadd.f32 %v34, %v122
    %v163 = vadd.f32 %v35, %v131
    %v164 = vadd.f32 %v36, %v140
    %v165 = vadd.f32 %v37, %v149
    %v166 = vadd.f32 %v38, %v158
    %v167 = vsel %vm39, %v47, %v159
    %v168 = vsel %vm40, %v48, %v160
    %v169 = vsel %vm41, %v49, %v161
    %v170 = vsel %vm42, %v50, %v162
    %v171 = vsel %vm43, %v51, %v163
    %v172 = vsel %vm44, %v52, %v164
    %v173 = vsel %vm45, %v53, %v165
    %v174 = vsel %vm46, %v54, %v166
    %175 = vst [vmem:[#allocation5] sm:$0xff] %v167
    %176 = vst [vmem:[#allocation5 + $0x8] sm:$0xff] %v168
    %177 = vst [vmem:[#allocation5 + $0x10] sm:$0xff] %v169
    %178 = vst [vmem:[#allocation5 + $0x18] sm:$0xff] %v170
    %179 = vst [vmem:[#allocation5 + $0x20] sm:$0xff] %v171
    %180 = vst [vmem:[#allocation5 + $0x28] sm:$0xff] %v172
    %181 = vst [vmem:[#allocation5 + $0x30] sm:$0xff] %v173
    %182 = vst [vmem:[#allocation5 + $0x38] sm:$0xff] %v174
    // Predicated region
    $region10: #{tpu_custom_call.1} parent=1 // pred_check
      _
    $region11: #{tpu_custom_call.1} parent=1 // pred_check_branch
      %184 = sbr.rel (0) target = $region13
    $region12: #{tpu_custom_call.1} parent=1 // pred_region
      %s186 = ssub.s32 1024, 1024
      %187 = vsyncadd [#allocation4], %s186
      %s188 = sshll.u32 [#allocation5], 4
      %s189 = int_to_ptr.vmem [resolvable:$true] %s188
      %194 = dma.vmem_to_hbm [thread:$0]  %s189, 1024, %s1, [#allocation4], 256, 256, 16
    $region13: #{tpu_custom_call.1} parent=1 // pred_fallthru
      _
    // Predicated region
    $region14: #{tpu_custom_call.1} parent=1 // pred_check
      _
    $region15: #{tpu_custom_call.1} parent=1 // pred_check_branch
      %196 = sbr.rel (0) target = $region17
    $region16: #{tpu_custom_call.1} parent=1 // pred_region
      %197 = dma.done [#allocation4], 1024
    $region17: #{tpu_custom_call.1} parent=1 // pred_fallthru
      _
    %198 = vsyncpa [#allocation3], 1
    %199 = vsyncpa [#allocation4], 1

</llo_original>
